<compile_context>
chip_gen: v7x
topology: tpu7x:2x2x1
jax: 0.10.0
libtpu: 0.0.40
codegen_flags: <defaults>
</compile_context>

<pallas_src>
import functools

import jax
import jax.numpy as jnp
from jax.experimental import pallas as pl
from jax.experimental.pallas import tpu as pltpu


def _round_up(x, m):
    return (x + m - 1) // m * m


def _choose_tiles(n):
    """Return (tm, tk, n_pad). tk is always a multiple of tm, n_pad a multiple of tk."""
    if n <= 512:
        n_pad = _round_up(max(n, 8), 8)
        return n_pad, n_pad, n_pad           # single-tile small-graph path
    if n <= 4096:
        tm, tk = 512, 1024
    else:
        tm, tk = 1024, 2048
    return tm, tk, _round_up(n, tk)


def build_graph_operands(edge_index, num_nodes, n_pad):
    """Build dense (A + I) directly at the padded size in bf16 (no second padded copy)
    plus d^{-1/2} in f32.  Message flow src -> dst (row = dst, col = src).
    Duplicate edges accumulate, matching PyG's scatter-add semantics."""
    src, dst = edge_index[0], edge_index[1]
    node_ids = jnp.arange(num_nodes, dtype=edge_index.dtype)

    a = jnp.zeros((n_pad, n_pad), jnp.bfloat16)
    a = a.at[dst, src].add(1.0)                     # adjacency (exact small ints in bf16)
    a = a.at[node_ids, node_ids].add(1.0)           # self loops (real nodes only)

    # degree computed O(E) from the edge list (avoids an N^2 reduction pass)
    deg = jnp.zeros((n_pad,), jnp.float32).at[dst].add(1.0)
    deg = deg.at[node_ids].add(1.0)
    d_inv_sqrt = jnp.where(deg > 0, jax.lax.rsqrt(jnp.maximum(deg, 1.0)), 0.0)
    return a, d_inv_sqrt


def _encoder_kernel(a_ref, x_ref, d_ref, w_ref, b_ref, alpha_ref, o_ref,
                    acc_ref, *, tk):
    """Grid: (row tiles 'parallel', neighbor/k tiles 'arbitrary').

    a_ref     : [tm, tk]          bf16 block of (A + I)               (streamed)
    x_ref     : [n_pad, cin_pad]  bf16 D^{-1/2}-scaled X              (VMEM resident)
    d_ref     : [tm, 1]           f32 per-row d^{-1/2}
    w_ref     : [cin_pad, h_pad]  f32 projection weight               (VMEM resident)
    b_ref     : [1, h_pad]        f32 bias
    alpha_ref : [1, h_pad]        f32 per-channel PReLU slope
    o_ref     : [tm, h_pad]       f32 output block
    acc_ref   : [tm, cin_pad]     f32 VMEM scratch accumulator
    """
    k = pl.program_id(1)

    @pl.when(k == 0)
    def _():
        acc_ref[...] = jnp.zeros_like(acc_ref)

    # accumulate (A + I) @ (D^{-1/2} X) over the neighbor (k) axis -- MXU, f32 acc
    x_blk = x_ref[pl.ds(pl.multiple_of(k * tk, tk), tk), :]
    acc_ref[...] += jnp.dot(a_ref[...], x_blk,
                            preferred_element_type=jnp.float32)

    @pl.when(k == pl.num_programs(1) - 1)
    def _():
        # row normalization D^{-1/2}  (cheap VPU work)
        ax = acc_ref[...] * d_ref[...]
        # project to hidden channels -- MXU
        h = jnp.dot(ax, w_ref[...], preferred_element_type=jnp.float32)
        # bias + per-channel PReLU (lane-dense: h_pad is a multiple of 128)
        h = h + b_ref[...]
        o_ref[...] = jnp.where(h > 0, h, alpha_ref[...] * h).astype(o_ref.dtype)


def encoder_forward(x, edge_index, weight, bias, alpha):
    """PReLU(GCNConv(x, edge_index)).

    x: [N, Cin] f32, edge_index: [2, E] int, weight: [Cin, H] f32,
    bias: [H] (or [1, H]) f32, alpha: [H] (or [1, H]) f32.  Returns [N, H] f32.
    """
    N, Cin = x.shape
    H = weight.shape[1]
    bias = jnp.reshape(bias, (1, H)).astype(jnp.float32)
    alpha = jnp.reshape(alpha, (1, H)).astype(jnp.float32)

    tm, tk, n_pad = _choose_tiles(N)
    cin_pad = _round_up(Cin, 128)
    h_pad = _round_up(H, 128)

    # (A + I) built at padded size in bf16, plus d^{-1/2}
    a_p, d_inv_sqrt = build_graph_operands(edge_index, N, n_pad)

    # fold column scaling D^{-1/2} into X (normalized A is never materialized);
    # bf16 feed to the MXU, f32 accumulation in-kernel
    x_scaled = (x.astype(jnp.float32) * d_inv_sqrt[:N, None]).astype(jnp.bfloat16)
    x_p = jnp.zeros((n_pad, cin_pad), jnp.bfloat16).at[:N, :Cin].set(x_scaled)
    d_p = d_inv_sqrt.reshape(n_pad, 1)
    w_p = jnp.zeros((cin_pad, h_pad), jnp.float32).at[:Cin, :H].set(
        weight.astype(jnp.float32))
    b_p = jnp.zeros((1, h_pad), jnp.float32).at[:, :H].set(bias)
    al_p = jnp.zeros((1, h_pad), jnp.float32).at[:, :H].set(alpha)

    grid = (n_pad // tm, n_pad // tk)

    # VMEM footprint -> vmem_limit_bytes with headroom (capped at v7x's 64 MiB physical)
    vmem_bytes = (2 * tm * tk * 2            # A blocks, double-buffered, bf16
                  + n_pad * cin_pad * 2      # resident X, bf16
                  + 2 * tm * h_pad * 4       # output blocks, double-buffered, f32
                  + tm * cin_pad * 4         # accumulator scratch, f32
                  + cin_pad * h_pad * 4      # resident W, f32
                  + 4 * (tm + 4 * h_pad))    # d, bias, alpha
    vmem_limit = int(min(max(2 * vmem_bytes + (4 << 20), 16 << 20), 64 << 20))

    out_pad = pl.pallas_call(
        functools.partial(_encoder_kernel, tk=tk),
        out_shape=jax.ShapeDtypeStruct((n_pad, h_pad), jnp.float32),
        grid_spec=pltpu.PrefetchScalarGridSpec(
            num_scalar_prefetch=0,
            grid=grid,
            in_specs=[
                pl.BlockSpec((tm, tk), lambda i, k: (i, k)),           # A + I (streamed)
                pl.BlockSpec((n_pad, cin_pad), lambda i, k: (0, 0)),   # X (VMEM resident)
                pl.BlockSpec((tm, 1), lambda i, k: (i, 0)),            # d^{-1/2} rows
                pl.BlockSpec((cin_pad, h_pad), lambda i, k: (0, 0)),   # W (resident)
                pl.BlockSpec((1, h_pad), lambda i, k: (0, 0)),         # bias
                pl.BlockSpec((1, h_pad), lambda i, k: (0, 0)),         # alpha
            ],
            out_specs=pl.BlockSpec((tm, h_pad), lambda i, k: (i, 0)),
            scratch_shapes=[pltpu.VMEM((tm, cin_pad), jnp.float32)],
        ),
        compiler_params=pltpu.CompilerParams(
            dimension_semantics=("parallel", "arbitrary"),
            vmem_limit_bytes=vmem_limit,
        ),
        cost_estimate=pl.CostEstimate(
            flops=2 * n_pad * n_pad * cin_pad + 2 * n_pad * cin_pad * h_pad,
            transcendentals=0,
            bytes_accessed=(2 * n_pad * n_pad          # A, bf16, streamed once
                            + 2 * n_pad * cin_pad      # X, bf16, resident
                            + 4 * cin_pad * h_pad      # W, f32
                            + 4 * n_pad * h_pad        # output, f32
                            + 4 * n_pad),              # d^{-1/2}
        ),
    )(a_p, x_p, d_p, w_p, b_p, al_p)

    return out_pad[:N, :H]


if __name__ == "__main__":
    key = jax.random.PRNGKey(0)
    k_x, k_w = jax.random.split(key)

    num_nodes = 8
    in_channels = 16
    hidden_channels = 32

    # node features
    x = jax.random.normal(k_x, (num_nodes, in_channels), dtype=jnp.float32)

    # deterministic small ring graph (both directions)
    src = jnp.arange(num_nodes, dtype=jnp.int32)
    dst = (src + 1) % num_nodes
    edge_index = jnp.stack(
        [jnp.concatenate([src, dst]), jnp.concatenate([dst, src])], axis=0
    )

    # parameters (GCNConv: glorot-ish weight, zero bias; PReLU default alpha=0.25)
    limit = jnp.sqrt(6.0 / (in_channels + hidden_channels))
    weight = jax.random.uniform(
        k_w, (in_channels, hidden_channels), jnp.float32, -limit, limit
    )
    bias = jnp.zeros((hidden_channels,), jnp.float32)      # 1-D, PyG layout
    alpha = jnp.full((hidden_channels,), 0.25, jnp.float32)  # 1-D, nn.PReLU layout

    out = encoder_forward(x, edge_index, weight, bias, alpha)
    jax.block_until_ready(out)

    # f32 reference (normalized adjacency materialized only here)
    a_dense = jnp.zeros((num_nodes, num_nodes), jnp.float32)
    a_dense = a_dense.at[edge_index[1], edge_index[0]].add(1.0)
    a_dense = a_dense + jnp.eye(num_nodes, dtype=jnp.float32)
    deg = a_dense.sum(axis=1)
    dinv = 1.0 / jnp.sqrt(deg)
    a_norm = dinv[:, None] * a_dense * dinv[None, :]
    ref_h = a_norm @ (x @ weight) + bias.reshape(1, -1)
    ref = jnp.where(ref_h > 0, ref_h, alpha.reshape(1, -1) * ref_h)

    assert out.shape == (num_nodes, hidden_channels)
    # bf16 feed for the A@X stage -> slightly relaxed tolerance vs the f32 reference
    assert jnp.allclose(out, ref, atol=3e-2, rtol=3e-2)

    print("KERNEL_OK")
</pallas_src>

<mosaic_0001>
module attributes {stable_mosaic.version = 11 : i64} {
  func.func @_encoder_kernel(%arg0: i32, %arg1: i32, %arg2: memref<8x8xbf16, #tpu.memory_space<vmem>>, %arg3: memref<8x128xbf16, #tpu.memory_space<vmem>>, %arg4: memref<8x1xf32, #tpu.memory_space<vmem>>, %arg5: memref<128x128xf32, #tpu.memory_space<vmem>>, %arg6: memref<1x128xf32, #tpu.memory_space<vmem>>, %arg7: memref<1x128xf32, #tpu.memory_space<vmem>>, %arg8: memref<8x128xf32, #tpu.memory_space<vmem>>, %arg9: memref<8x128xf32, #tpu.memory_space<vmem>>) attributes {dimension_semantics = [#tpu.dimension_semantics<parallel>, #tpu.dimension_semantics<arbitrary>], iteration_bounds = array<i64: 1, 1>, scalar_prefetch = 0 : i64, scratch_operands = 1 : i64, tpu.core_type = #tpu.core_type<tc>, window_params = [{transform_indices = @transform_0, window_bounds = array<i64: 8, 8>}, {pipeline_mode = #tpu.pipeline_mode<synchronous>, transform_indices = @transform_1, window_bounds = array<i64: 8, 128>}, {transform_indices = @transform_2, window_bounds = array<i64: 8, 1>}, {pipeline_mode = #tpu.pipeline_mode<synchronous>, transform_indices = @transform_3, window_bounds = array<i64: 128, 128>}, {pipeline_mode = #tpu.pipeline_mode<synchronous>, transform_indices = @transform_4, window_bounds = array<i64: 1, 128>}, {pipeline_mode = #tpu.pipeline_mode<synchronous>, transform_indices = @transform_5, window_bounds = array<i64: 1, 128>}, {transform_indices = @transform_6, window_bounds = array<i64: 8, 128>}]} {
    %c0_i32 = arith.constant 0 : i32
    %0 = arith.cmpi eq, %arg1, %c0_i32 : i32
    %1 = arith.extui %0 : i1 to i32
    %c0_i32_0 = arith.constant 0 : i32
    %2 = arith.cmpi ne, %1, %c0_i32_0 : i32
    scf.if %2 {
      %cst_9 = arith.constant 0.000000e+00 : f32
      %15 = vector.broadcast %cst_9 : f32 to vector<8x128xf32>
      %c0_10 = arith.constant 0 : index
      %c0_11 = arith.constant 0 : index
      %16 = vector.load %arg9[%c0_10, %c0_11] : memref<8x128xf32, #tpu.memory_space<vmem>>, vector<8x128xf32>
      tpu.vector_store %arg9[%c0_10, %c0_11], %15 {strides = array<i32>} : memref<8x128xf32, #tpu.memory_space<vmem>>, vector<8x128xf32>,
    } else {
    }
    %c8_i32 = arith.constant 8 : i32
    %3 = arith.muli %arg1, %c8_i32 : i32
    %4 = tpu.assume_multiple %3, 8 : i32
    %5 = arith.index_cast %4 : i32 to index
    %c0 = arith.constant 0 : index
    %6 = vector.load %arg3[%5, %c0] : memref<8x128xbf16, #tpu.memory_space<vmem>>, vector<8x128xbf16>
    %c0_1 = arith.constant 0 : index
    %c0_2 = arith.constant 0 : index
    %7 = vector.load %arg9[%c0_1, %c0_2] : memref<8x128xf32, #tpu.memory_space<vmem>>, vector<8x128xf32>
    %c0_3 = arith.constant 0 : index
    %c0_4 = arith.constant 0 : index
    %8 = vector.load %arg2[%c0_3, %c0_4] : memref<8x8xbf16, #tpu.memory_space<vmem>>, vector<8x8xbf16>
    %cst = arith.constant dense<0.000000e+00> : vector<8x128xf32>
    %9 = tpu.matmul %8, %6, %cst {dimension_numbers = #tpu.dot_dimension_numbers<[1], [0], [0], [1], [0, 0, 1, 1], [], []>} : vector<8x8xbf16>, vector<8x128xbf16>, vector<8x128xf32> -> vector<8x128xf32>
    %10 = arith.addf %7, %9 : vector<8x128xf32>
    %c0_5 = arith.constant 0 : index
    %c0_6 = arith.constant 0 : index
    %11 = vector.load %arg9[%c0_5, %c0_6] : memref<8x128xf32, #tpu.memory_space<vmem>>, vector<8x128xf32>
    tpu.vector_store %arg9[%c0_5, %c0_6], %10 {strides = array<i32>} : memref<8x128xf32, #tpu.memory_space<vmem>>, vector<8x128xf32>,
    %c0_i32_7 = arith.constant 0 : i32
    %12 = arith.cmpi eq, %arg1, %c0_i32_7 : i32
    %13 = arith.extui %12 : i1 to i32
    %c0_i32_8 = arith.constant 0 : i32
    %14 = arith.cmpi ne, %13, %c0_i32_8 : i32
    scf.if %14 {
      %c0_9 = arith.constant 0 : index
      %c0_10 = arith.constant 0 : index
      %15 = vector.load %arg9[%c0_9, %c0_10] : memref<8x128xf32, #tpu.memory_space<vmem>>, vector<8x128xf32>
      %c0_11 = arith.constant 0 : index
      %c0_12 = arith.constant 0 : index
      %16 = vector.load %arg4[%c0_11, %c0_12] : memref<8x1xf32, #tpu.memory_space<vmem>>, vector<8x1xf32>
      %17 = vector.broadcast %16 : vector<8x1xf32> to vector<8x128xf32>
      %18 = arith.mulf %15, %17 : vector<8x128xf32>
      %c0_13 = arith.constant 0 : index
      %c0_14 = arith.constant 0 : index
      %19 = vector.load %arg5[%c0_13, %c0_14] : memref<128x128xf32, #tpu.memory_space<vmem>>, vector<128x128xf32>
      %cst_15 = arith.constant dense<0.000000e+00> : vector<8x128xf32>
      %20 = tpu.matmul %18, %19, %cst_15 {dimension_numbers = #tpu.dot_dimension_numbers<[1], [0], [0], [1], [0, 0, 1, 1], [], []>} : vector<8x128xf32>, vector<128x128xf32>, vector<8x128xf32> -> vector<8x128xf32>
      %c0_16 = arith.constant 0 : index
      %c0_17 = arith.constant 0 : index
      %21 = vector.load %arg6[%c0_16, %c0_17] : memref<1x128xf32, #tpu.memory_space<vmem>>, vector<1x128xf32>
      %22 = vector.broadcast %21 : vector<1x128xf32> to vector<8x128xf32>
      %23 = arith.addf %20, %22 : vector<8x128xf32>
      %cst_18 = arith.constant 0.000000e+00 : f32
      %24 = vector.broadcast %cst_18 : f32 to vector<8x128xf32>
      %25 = arith.cmpf ogt, %23, %24 : vector<8x128xf32>
      %c0_19 = arith.constant 0 : index
      %c0_20 = arith.constant 0 : index
      %26 = vector.load %arg7[%c0_19, %c0_20] : memref<1x128xf32, #tpu.memory_space<vmem>>, vector<1x128xf32>
      %27 = vector.broadcast %26 : vector<1x128xf32> to vector<8x128xf32>
      %28 = arith.mulf %27, %23 : vector<8x128xf32>
      %29 = arith.select %25, %23, %28 : vector<8x128xi1>, vector<8x128xf32>
      %c0_21 = arith.constant 0 : index
      %c0_22 = arith.constant 0 : index
      %30 = vector.load %arg8[%c0_21, %c0_22] : memref<8x128xf32, #tpu.memory_space<vmem>>, vector<8x128xf32>
      tpu.vector_store %arg8[%c0_21, %c0_22], %29 {strides = array<i32>} : memref<8x128xf32, #tpu.memory_space<vmem>>, vector<8x128xf32>,
    } else {
    }
    return
  }
  func.func @transform_0(%arg0: i32, %arg1: i32) -> (i32, i32) {
    %c0_i32 = arith.constant 0 : i32
    return %arg0, %arg1 : i32, i32
  }
  func.func @transform_1(%arg0: i32, %arg1: i32) -> (i32, i32) {
    %c0_i32 = arith.constant 0 : i32
    %c0_i32_0 = arith.constant 0 : i32
    %c0_i32_1 = arith.constant 0 : i32
    return %c0_i32, %c0_i32_0 : i32, i32
  }
  func.func @transform_2(%arg0: i32, %arg1: i32) -> (i32, i32) {
    %c0_i32 = arith.constant 0 : i32
    %c0_i32_0 = arith.constant 0 : i32
    return %arg0, %c0_i32 : i32, i32
  }
  func.func @transform_3(%arg0: i32, %arg1: i32) -> (i32, i32) {
    %c0_i32 = arith.constant 0 : i32
    %c0_i32_0 = arith.constant 0 : i32
    %c0_i32_1 = arith.constant 0 : i32
    return %c0_i32, %c0_i32_0 : i32, i32
  }
  func.func @transform_4(%arg0: i32, %arg1: i32) -> (i32, i32) {
    %c0_i32 = arith.constant 0 : i32
    %c0_i32_0 = arith.constant 0 : i32
    %c0_i32_1 = arith.constant 0 : i32
    return %c0_i32, %c0_i32_0 : i32, i32
  }
  func.func @transform_5(%arg0: i32, %arg1: i32) -> (i32, i32) {
    %c0_i32 = arith.constant 0 : i32
    %c0_i32_0 = arith.constant 0 : i32
    %c0_i32_1 = arith.constant 0 : i32
    return %c0_i32, %c0_i32_0 : i32, i32
  }
  func.func @transform_6(%arg0: i32, %arg1: i32) -> (i32, i32) {
    %c0_i32 = arith.constant 0 : i32
    %c0_i32_0 = arith.constant 0 : i32
    return %arg0, %c0_i32 : i32, i32
  }
}

</mosaic_0001>

<llo_original>
// kernel: tpu_custom_call.1
$region0: #{tpu_custom_call.1}
  #allocation0 [shape = 'u32[]', space=smem, size = 0x4, offset = 0x4, fixed_abs, tag = 'smem constant byte address 0x4 - core index']
  #allocation1 [shape = 'u32[144,128]{1,0:T(1,128)}', space=vmem, size = 0x12000, scoped, tag = 'internal scratch']
  #allocation2 [shape = 'f32[8,128]{1,0:T(8,128)}', space=vmem, size = 0x1000, scoped, tag = 'scratch operand']
  %s0 = inlined_call_operand.vmem [shape: bf16[8,8], index: 0, kind: input, shape index: {}]
  %s1 = inlined_call_operand.vmem [shape: bf16[8,128], index: 1, kind: input, shape index: {}]
  %s2 = inlined_call_operand.vmem [shape: f32[8,1], index: 2, kind: input, shape index: {}]
  %s3 = inlined_call_operand.hbm [shape: f32[128,128], index: 3, kind: input, shape index: {}]
  %s4 = inlined_call_operand.vmem [shape: f32[1,128], index: 4, kind: input, shape index: {}]
  %s5 = inlined_call_operand.vmem [shape: f32[1,128], index: 5, kind: input, shape index: {}]
  %s6 = inlined_call_operand.hbm [shape: f32[8,128], index: 6, kind: output, shape index: {}]
  %s7 = sld [smem:[#allocation0]]
  $region46: #{tpu_custom_call.1} parent=0
    _
  %s9 = ssub.s32 1, %s7
  %s10 = scalar_select 0, %s9, %s7
  $region1: #{tpu_custom_call.1} parent=0
    #allocation3 [shape = 'u8[65536]{0}', space=vmem, size = 0x10000, scoped, tag = 'input window, operand 3, single buffered']
    #allocation4 [shape = 's32[1]{0}', space=sflag, size = 0x4, scoped, tag = 'scoped memory for tpu_custom_call.1']
    #allocation5 [shape = 's32[1]{0}', space=sflag, size = 0x4, scoped, tag = 'scoped memory for tpu_custom_call.1']
    #allocation6 [shape = 'u8[4096]{0}', space=vmem, size = 0x1000, scoped, tag = 'output window, operand 0, single buffered']
    %11 = vsyncpa [#allocation4], 0
    %12 = vsyncpa [#allocation5], 0
    // Predicated region
    $region2: #{tpu_custom_call.1} parent=1 // pred_check
      _
    $region3: #{tpu_custom_call.1} parent=1 // pred_check_branch
      %14 = sbr.rel (0) target = $region5
    $region4: #{tpu_custom_call.1} parent=1 // pred_region
      _
    $region5: #{tpu_custom_call.1} parent=1 // pred_fallthru
      _
    // Predicated region
    $region6: #{tpu_custom_call.1} parent=1 // pred_check
      _
    $region7: #{tpu_custom_call.1} parent=1 // pred_check_branch
      %16 = sbr.rel (0) target = $region9
    $region8: #{tpu_custom_call.1} parent=1 // pred_region
      _
    $region9: #{tpu_custom_call.1} parent=1 // pred_fallthru
      _
    // Predicated region
    $region10: #{tpu_custom_call.1} parent=1 // pred_check
      _
    $region11: #{tpu_custom_call.1} parent=1 // pred_check_branch
      %18 = sbr.rel (0) target = $region13
    $region12: #{tpu_custom_call.1} parent=1 // pred_region
      _
    $region13: #{tpu_custom_call.1} parent=1 // pred_fallthru
      _
    // Predicated region
    $region14: #{tpu_custom_call.1} parent=1 // pred_check
      _
    $region15: #{tpu_custom_call.1} parent=1 // pred_check_branch
      %20 = sbr.rel (0) target = $region17
    $region16: #{tpu_custom_call.1} parent=1 // pred_region
      %s22 = ssub.s32 2048, 2048
      %23 = vsyncadd [#allocation4], %s22
      %s24 = sshll.u32 [#allocation3], 4
      %s25 = int_to_ptr.vmem [resolvable:$true] %s24
      %30 = dma.hbm_to_vmem [thread:$0]  %s3, 2048, %s25, [#allocation4], 128, 128, 8
    $region17: #{tpu_custom_call.1} parent=1 // pred_fallthru
      _
    // Predicated region
    $region18: #{tpu_custom_call.1} parent=1 // pred_check
      _
    $region19: #{tpu_custom_call.1} parent=1 // pred_check_branch
      %32 = sbr.rel (0) target = $region21
    $region20: #{tpu_custom_call.1} parent=1 // pred_region
      _
    $region21: #{tpu_custom_call.1} parent=1 // pred_fallthru
      _
    // Predicated region
    $region22: #{tpu_custom_call.1} parent=1 // pred_check
      _
    $region23: #{tpu_custom_call.1} parent=1 // pred_check_branch
      %34 = sbr.rel (0) target = $region25
    $region24: #{tpu_custom_call.1} parent=1 // pred_region
      _
    $region25: #{tpu_custom_call.1} parent=1 // pred_fallthru
      _
    // Predicated region
    $region26: #{tpu_custom_call.1} parent=1 // pred_check
      _
    $region27: #{tpu_custom_call.1} parent=1 // pred_check_branch
      %36 = sbr.rel (0) target = $region29
    $region28: #{tpu_custom_call.1} parent=1 // pred_region
      %37 = dma.done [#allocation4], 2048
    $region29: #{tpu_custom_call.1} parent=1 // pred_fallthru
      _
    %p39 = scmp.eq.s32.totalorder 0, 0
    // Predicated region
    $region30: #{tpu_custom_call.1} parent=1 // pred_check
      %p40 = pneg %p39
    $region31: #{tpu_custom_call.1} parent=1 // pred_check_branch
      %42 = sbr.rel (%p40) target = $region33
    $region32: #{tpu_custom_call.1} parent=1 // pred_region
      %43 = vst [vmem:[#allocation2] sm:$0xff] 0.0
    $region33: #{tpu_custom_call.1} parent=1 // pred_fallthru
      _
    %s44 = smul.u32 0, 8
    %s45 = sshra.s32 %s44, 3
    %s46 = sand.u32 %s44, 7
    %s47 = smul.addr %s45, 4
    %s48 = scalar_lea.vmem %s1, %s47
    %v49 = vld [vmem:[%s48] sm:$0xf]
    %v50 = vld [vmem:[#allocation2] sm:$0xff]
    %v51 = vld [vmem:[%s0] sm:$0xf]
    %vm52 = vcmask 64512
    %v54 = vsel %vm52, %v51, 0
    %vm56 = vcmask 1043456
    %v58 = vsel %vm56, %v49, 0
    %60 = vmatprep.subr.bf16.mxu0 0
    %61 = vmatpush1.bf16.msra.mxu0 %v58
    %62 = vmatprep.subr.bf16.mxu0 0
    %63 = vmatpush1.bf16.msra.mxu0 0
    %64 = vmatprep.subr.bf16.mxu0 0
    %65 = vmatpush1.bf16.msra.mxu0 0
    %66 = vmatprep.subr.bf16.mxu0 0
    %67 = vmatpush1.bf16.msra.mxu0 0
    %68 = vmatprep.subr.bf16.mxu0 0
    %69 = vmatpush1.bf16.msra.mxu0 0
    %70 = vmatprep.subr.bf16.mxu0 0
    %71 = vmatpush1.bf16.msra.mxu0 0
    %72 = vmatprep.subr.bf16.mxu0 0
    %73 = vmatpush1.bf16.msra.mxu0 0
    %74 = vmatprep.subr.bf16.mxu0 0
    %75 = vmatpush1.bf16.msra.mxu0 0
    %76 = vmatprep.subr.bf16.mxu0 0
    %77 = vmatpush1.bf16.msra.mxu0 0
    %78 = vmatprep.subr.bf16.mxu0 0
    %79 = vmatpush1.bf16.msra.mxu0 0
    %80 = vmatprep.subr.bf16.mxu0 0
    %81 = vmatpush1.bf16.msra.mxu0 0
    %82 = vmatprep.subr.bf16.mxu0 0
    %83 = vmatpush1.bf16.msra.mxu0 0
    %84 = vmatprep.subr.bf16.mxu0 0
    %85 = vmatpush1.bf16.msra.mxu0 0
    %86 = vmatprep.subr.bf16.mxu0 0
    %87 = vmatpush1.bf16.msra.mxu0 0
    %88 = vmatprep.subr.bf16.mxu0 0
    %89 = vmatpush1.bf16.msra.mxu0 0
    %90 = vmatprep.subr.bf16.mxu0 0
    %91 = vmatpush1.bf16.msra.mxu0 0
    %92 = vmatprep.mubr.bf16.mxu0 0
    %93 = vmatmul.mubr.bf16.gmra.mrb[0].mxu0 %v54
    %v94 = vpop.f32.mrb[0].mxu0
    %v95 = vadd.f32 0.0, %v94
    %v96 = vpop.f32.mrb[0].mxu0
    %v97 = vpop.f32.mrb[0].mxu0
    %v98 = vpop.f32.mrb[0].mxu0
    %99 = vdwg.mxu0
    %v100 = vadd.f32 %v50, %v95
    %101 = vst [vmem:[#allocation2] sm:$0xff] %v100
    // Predicated region
    $region34: #{tpu_custom_call.1} parent=1 // pred_check
      %p102 = pneg %p39
    $region35: #{tpu_custom_call.1} parent=1 // pred_check_branch
      %104 = sbr.rel (%p102) target = $region37
    $region36: #{tpu_custom_call.1} parent=1 // pred_region
      %v105 = vld [vmem:[#allocation2] sm:$0xff]
      %v106 = vld [vmem:[%s2] sm:$0xff]
      %108 = vset.pattern.permute.xlu0 0
      %109 = vperm.xlu0 %108, %v106
      %v110 = vpop.permute.xlu0 %109
      %v112 = vmul.f32 %v105, %v110
      %v113 = vld [vmem:[#allocation3] sm:$0xff]
      %v114 = vld [vmem:[#allocation3 + $0x8] sm:$0xff]
      %v115 = vld [vmem:[#allocation3 + $0x10] sm:$0xff]
      %v116 = vld [vmem:[#allocation3 + $0x18] sm:$0xff]
      %v117 = vld [vmem:[#allocation3 + $0x20] sm:$0xff]
      %v118 = vld [vmem:[#allocation3 + $0x28] sm:$0xff]
      %v119 = vld [vmem:[#allocation3 + $0x30] sm:$0xff]
      %v120 = vld [vmem:[#allocation3 + $0x38] sm:$0xff]
      %v121 = vld [vmem:[#allocation3 + $0x40] sm:$0xff]
      %v122 = vld [vmem:[#allocation3 + $0x48] sm:$0xff]
      %v123 = vld [vmem:[#allocation3 + $0x50] sm:$0xff]
      %v124 = vld [vmem:[#allocation3 + $0x58] sm:$0xff]
      %v125 = vld [vmem:[#allocation3 + $0x60] sm:$0xff]
      %v126 = vld [vmem:[#allocation3 + $0x68] sm:$0xff]
      %v127 = vld [vmem:[#allocation3 + $0x70] sm:$0xff]
      %v128 = vld [vmem:[#allocation3 + $0x78] sm:$0xff]
      %v129 = vld [vmem:[%s4] sm:$0x1]
      %v131 = vlaneseq
      %v132 = vshrl.u32 %v131, 7
      %v133 = vsub.s32 0, %v132
      %v134 = vrot.slane %v129, %v133
      %136 = vmatprep.subr.mxu0 0.0
      %137 = vmatpush1.msra.mxu0 %v113
      %138 = vmatprep.subr.mxu0 0.0
      %139 = vmatpush1.msra.mxu0 %v114
      %140 = vmatprep.subr.mxu0 0.0
      %141 = vmatpush1.msra.mxu0 %v115
      %142 = vmatprep.subr.mxu0 0.0
      %143 = vmatpush1.msra.mxu0 %v116
      %144 = vmatprep.subr.mxu0 0.0
      %145 = vmatpush1.msra.mxu0 %v117
      %146 = vmatprep.subr.mxu0 0.0
      %147 = vmatpush1.msra.mxu0 %v118
      %148 = vmatprep.subr.mxu0 0.0
      %149 = vmatpush1.msra.mxu0 %v119
      %150 = vmatprep.subr.mxu0 0.0
      %151 = vmatpush1.msra.mxu0 %v120
      %152 = vmatprep.subr.mxu0 0.0
      %153 = vmatpush1.msra.mxu0 %v121
      %154 = vmatprep.subr.mxu0 0.0
      %155 = vmatpush1.msra.mxu0 %v122
      %156 = vmatprep.subr.mxu0 0.0
      %157 = vmatpush1.msra.mxu0 %v123
      %158 = vmatprep.subr.mxu0 0.0
      %159 = vmatpush1.msra.mxu0 %v124
      %160 = vmatprep.subr.mxu0 0.0
      %161 = vmatpush1.msra.mxu0 %v125
      %162 = vmatprep.subr.mxu0 0.0
      %163 = vmatpush1.msra.mxu0 %v126
      %164 = vmatprep.subr.mxu0 0.0
      %165 = vmatpush1.msra.mxu0 %v127
      %166 = vmatprep.subr.mxu0 0.0
      %167 = vmatpush1.msra.mxu0 %v128
      %168 = vmatprep.subr.mxu0 0.0
      %169 = vmatpush1.msra.mxu0 0.0
      %170 = vmatprep.subr.mxu0 0.0
      %171 = vmatpush1.msra.mxu0 0.0
      %172 = vmatprep.subr.mxu0 0.0
      %173 = vmatpush1.msra.mxu0 0.0
      %174 = vmatprep.subr.mxu0 0.0
      %175 = vmatpush1.msra.mxu0 0.0
      %176 = vmatprep.subr.mxu0 0.0
      %177 = vmatpush1.msra.mxu0 0.0
      %178 = vmatprep.subr.mxu0 0.0
      %179 = vmatpush1.msra.mxu0 0.0
      %180 = vmatprep.subr.mxu0 0.0
      %181 = vmatpush1.msra.mxu0 0.0
      %182 = vmatprep.subr.mxu0 0.0
      %183 = vmatpush1.msra.mxu0 0.0
      %184 = vmatprep.subr.mxu0 0.0
      %185 = vmatpush1.msra.mxu0 0.0
      %186 = vmatprep.subr.mxu0 0.0
      %187 = vmatpush1.msra.mxu0 0.0
      %188 = vmatprep.subr.mxu0 0.0
      %189 = vmatpush1.msra.mxu0 0.0
      %190 = vmatprep.subr.mxu0 0.0
      %191 = vmatpush1.msra.mxu0 0.0
      %192 = vmatprep.subr.mxu0 0.0
      %193 = vmatpush1.msra.mxu0 0.0
      %194 = vmatprep.subr.mxu0 0.0
      %195 = vmatpush1.msra.mxu0 0.0
      %196 = vmatprep.subr.mxu0 0.0
      %197 = vmatpush1.msra.mxu0 0.0
      %198 = vmatprep.subr.mxu0 0.0
      %199 = vmatpush1.msra.mxu0 0.0
      %200 = vmatprep.mubr.f32.mxu0 0.0
      %201 = vmatmul.mubr.f32.gmra.mrb[0].mxu0 %v112
      %v202 = vpop.f32.mrb[0].mxu0
      %v203 = vadd.f32 %v134, %v202
      %v204 = vpop.f32.mrb[0].mxu0
      %205 = vdwg.mxu0
      %vm206 = vcmp.gt.f32.partialorder %v203, 0.0
      %v207 = vld [vmem:[%s5] sm:$0x1]
      %v209 = vlaneseq
      %v210 = vshrl.u32 %v209, 7
      %v211 = vsub.s32 0, %v210
      %v212 = vrot.slane %v207, %v211
      %v214 = vmul.f32 %v212, %v203
      %v215 = vsel %vm206, %v203, %v214
      %216 = vst [vmem:[#allocation6] sm:$0xff] %v215
    $region37: #{tpu_custom_call.1} parent=1 // pred_fallthru
      _
    // Predicated region
    $region38: #{tpu_custom_call.1} parent=1 // pred_check
      _
    $region39: #{tpu_custom_call.1} parent=1 // pred_check_branch
      %218 = sbr.rel (0) target = $region41
    $region40: #{tpu_custom_call.1} parent=1 // pred_region
      %s220 = ssub.s32 128, 128
      %221 = vsyncadd [#allocation5], %s220
      %s223 = sshll.u32 [#allocation6], 4
      %s224 = int_to_ptr.vmem [resolvable:$true] %s223
      %226 = dma.vmem_to_hbm [thread:$0]  %s224, 128, %s6, [#allocation5]
    $region41: #{tpu_custom_call.1} parent=1 // pred_fallthru
      _
    // Predicated region
    $region42: #{tpu_custom_call.1} parent=1 // pred_check
      _
    $region43: #{tpu_custom_call.1} parent=1 // pred_check_branch
      %228 = sbr.rel (0) target = $region45
    $region44: #{tpu_custom_call.1} parent=1 // pred_region
      %229 = dma.done [#allocation5], 128
    $region45: #{tpu_custom_call.1} parent=1 // pred_fallthru
      _
    %230 = vsyncpa [#allocation4], 1
    %231 = vsyncpa [#allocation5], 1

</llo_original>
